<compile_context>
chip_gen: v5e
topology: v5e:2x2
jax: 0.10.0
libtpu: 0.0.40
codegen_flags: <defaults>
</compile_context>

<pallas_src>
import functools

import jax
import jax.numpy as jnp
from jax.experimental import pallas as pl
from jax.experimental.pallas import tpu as pltpu


def _round_up(x, m):
    return ((x + m - 1) // m) * m


def _cdiv(a, b):
    return (a + b - 1) // b


def _vmem_capacity_bytes():
    """Generation-aware physical VMEM (v5e/v6e: 128 MiB, v7x: 64 MiB per TC)."""
    try:
        return int(pltpu.get_tpu_info().vmem_capacity_bytes)
    except Exception:
        return 64 * 1024 * 1024  # conservative fallback (v7x per-TC size)


def _nll_partial_kernel(pred_ref, target_ref, out_ref, *, n_rows, tile_n,
                        needs_row_mask):
    # pred_ref:   (TILE_N, C) log-probabilities (input dtype, NOT upcast)
    # target_ref: (TILE_N, 1) int32 class indices
    # out_ref:    (1, 128) f32 -- this tile's partial sum broadcast across lanes
    pred = pred_ref[...]
    tgt = target_ref[...]

    class_ids = jax.lax.broadcasted_iota(jnp.int32, pred.shape, 1)
    match = class_ids == tgt
    if needs_row_mask:
        # Ragged last tile: rows past the real batch contribute exactly 0.
        row_ids = jax.lax.broadcasted_iota(jnp.int32, (pred.shape[0], 1), 0)
        match = match & ((pl.program_id(0) * tile_n + row_ids) < n_rows)

    # Select in the input dtype; the class-axis reduce is exact since each row
    # has at most one nonzero.  Only the (TILE_N, 1) column is cast to f32.
    picked = jnp.where(match, pred, jnp.zeros((), pred.dtype))
    per_row = jnp.sum(picked, axis=1, keepdims=True)                 # (TILE_N, 1)
    tile_sum = jnp.sum(per_row.astype(jnp.float32), axis=0,
                       keepdims=True)                                # (1, 1)
    out_ref[...] = jnp.broadcast_to(tile_sum, out_ref.shape)         # (1, 128)


def nll_loss(pred, target, *, tile_n=None):
    """Equivalent of get_loss.forward: F.nll_loss(pred, target), mean reduction.

    pred: (N, C) log-probabilities (f32 or bf16 -- bf16 stays bf16 on the wire).
    target: (N,) integer class ids.
    """
    if isinstance(pred, tuple):
        pred = pred[0]

    n, c = pred.shape
    itemsize = jnp.dtype(pred.dtype).itemsize
    row_align = {4: 8, 2: 16, 1: 32}.get(itemsize, 8)

    vmem = _vmem_capacity_bytes()
    if tile_n is None:
        # Pred tile cap: ~1/8 of physical VMEM, at most 16 MiB, so the
        # double-buffered footprint fits the scoped limit on every generation.
        tile_bytes_cap = min(vmem // 8, 16 * 1024 * 1024)
        cap_rows = max(
            row_align,
            (tile_bytes_cap // max(1, c * itemsize)) // row_align * row_align)
        # Prefer >=4 tiles so the "parallel" axis feeds both v7x TensorCores.
        if n >= 4 * row_align:
            want = 4
        elif n >= 2 * row_align:
            want = 2
        else:
            want = 1
        per_tile = _round_up(_cdiv(n, want), row_align)
        tile_n = max(row_align, min(cap_rows, per_tile))
    else:
        tile_n = _round_up(max(1, int(tile_n)), row_align)

    if tile_n >= n:
        tile_n = n  # single full-array block: no alignment constraint needed

    num_tiles = _cdiv(n, tile_n)
    needs_row_mask = (num_tiles * tile_n) != n

    tgt2d = target.astype(jnp.int32).reshape(n, 1)

    kernel = functools.partial(
        _nll_partial_kernel,
        n_rows=n, tile_n=tile_n, needs_row_mask=needs_row_mask)

    # 48 MiB scoped VMEM on v7x (64 MiB/TC), 64 MiB on v5e/v6e (128 MiB).
    vmem_limit = int(min(64 * 1024 * 1024,
                         max(32 * 1024 * 1024, (vmem * 3) // 4)))

    cost = pl.CostEstimate(
        flops=2 * n * c,
        transcendentals=0,
        bytes_accessed=n * c * itemsize + n * 4 + num_tiles * 128 * 4,
    )

    partials = pl.pallas_call(
        kernel,
        out_shape=jax.ShapeDtypeStruct((1, num_tiles * 128), jnp.float32),
        grid=(num_tiles,),
        in_specs=[
            pl.BlockSpec((tile_n, c), lambda i: (i, 0)),
            pl.BlockSpec((tile_n, 1), lambda i: (i, 0)),
        ],
        out_specs=pl.BlockSpec((1, 128), lambda i: (0, i)),
        compiler_params=pltpu.CompilerParams(
            dimension_semantics=("parallel",),
            vmem_limit_bytes=vmem_limit,
        ),
        cost_estimate=cost,
    )(pred, tgt2d)

    # Each tile broadcast its partial over 128 lanes; take lane 0 of each.
    per_tile = partials.reshape(num_tiles, 128)[:, 0]
    scale = -1.0 / float(n)  # compile-time constant; mean over the real N rows
    return jnp.sum(per_tile) * scale


def _ref_nll(pred, target):
    n = pred.shape[0]
    return -jnp.mean(pred[jnp.arange(n), target].astype(jnp.float32))


if __name__ == "__main__":
    key = jax.random.PRNGKey(0)
    k1, k2, k3, k4, k5, k6 = jax.random.split(key, 6)

    # 1) Small classifier head: batch=8, num_classes=32, f32, single full tile.
    N, C = 8, 32
    logits = jax.random.normal(k1, (N, C), dtype=jnp.float32)
    pred = jax.nn.log_softmax(logits, axis=-1)
    target = jax.random.randint(k2, (N,), 0, C, dtype=jnp.int32)
    loss = nll_loss(pred, target)
    jax.block_until_ready(loss)
    ref = _ref_nll(pred, target)
    assert jnp.allclose(loss, ref, atol=1e-6, rtol=1e-6), (loss, ref)

    # 2) Ragged batch (N not a tile multiple): exercises the in-kernel row mask
    #    and multi-tile "parallel" grid with NO wrapper-side padding.
    N2, C2 = 37, 40
    logits2 = jax.random.normal(k3, (N2, C2), dtype=jnp.float32)
    pred2 = jax.nn.log_softmax(logits2, axis=-1)
    target2 = jax.random.randint(k4, (N2,), 0, C2, dtype=jnp.int32)
    loss2 = nll_loss(pred2, target2)
    jax.block_until_ready(loss2)
    ref2 = _ref_nll(pred2, target2)
    assert jnp.allclose(loss2, ref2, atol=1e-5, rtol=1e-5), (loss2, ref2)

    # 3) bf16 on the wire: select/class-reduce stay bf16 in-kernel; only the
    #    per-row column is accumulated in f32.  Also ragged + multi-tile.
    N3, C3 = 40, 48
    logits3 = jax.random.normal(k5, (N3, C3), dtype=jnp.float32)
    pred3 = jax.nn.log_softmax(logits3, axis=-1).astype(jnp.bfloat16)
    target3 = jax.random.randint(k6, (N3,), 0, C3, dtype=jnp.int32)
    loss3 = nll_loss(pred3, target3)
    jax.block_until_ready(loss3)
    ref3 = _ref_nll(pred3, target3)
    assert jnp.allclose(loss3, ref3, atol=1e-5, rtol=1e-5), (loss3, ref3)

    print("KERNEL_OK")
</pallas_src>

<mosaic_0001>
module attributes {stable_mosaic.version = 11 : i64} {
  func.func @_nll_partial_kernel(%arg0: i32, %arg1: memref<8x32xf32, #tpu.memory_space<vmem>>, %arg2: memref<8x1xi32, #tpu.memory_space<vmem>>, %arg3: memref<1x128xf32, #tpu.memory_space<vmem>>) attributes {dimension_semantics = [#tpu.dimension_semantics<parallel>], iteration_bounds = array<i64: 1>, scalar_prefetch = 0 : i64, scratch_operands = 0 : i64, tpu.core_type = #tpu.core_type<tc>, window_params = [{transform_indices = @transform_0, window_bounds = array<i64: 8, 32>}, {transform_indices = @transform_1, window_bounds = array<i64: 8, 1>}, {transform_indices = @transform_2, window_bounds = array<i64: 1, 128>}]} {
    %c0 = arith.constant 0 : index
    %c0_0 = arith.constant 0 : index
    %0 = vector.load %arg1[%c0, %c0_0] : memref<8x32xf32, #tpu.memory_space<vmem>>, vector<8x32xf32>
    %c0_1 = arith.constant 0 : index
    %c0_2 = arith.constant 0 : index
    %1 = vector.load %arg2[%c0_1, %c0_2] : memref<8x1xi32, #tpu.memory_space<vmem>>, vector<8x1xi32>
    %2 = tpu.iota {dimensions = array<i32: 1>} : vector<8x32xi32>
    %3 = vector.broadcast %1 : vector<8x1xi32> to vector<8x32xi32>
    %4 = arith.cmpi eq, %2, %3 : vector<8x32xi32>
    %cst = arith.constant 0.000000e+00 : f32
    %5 = vector.broadcast %cst : f32 to vector<8x32xf32>
    %6 = arith.select %4, %0, %5 : vector<8x32xi1>, vector<8x32xf32>
    %cst_3 = arith.constant dense<0.000000e+00> : vector<8xf32>
    %7 = vector.multi_reduction <add>, %6, %cst_3 [1] : vector<8x32xf32> to vector<8xf32>
    %8 = vector.shape_cast %7 : vector<8xf32> to vector<8x1xf32>
    %cst_4 = arith.constant dense<0.000000e+00> : vector<1xf32>
    %9 = vector.multi_reduction <add>, %8, %cst_4 [0] : vector<8x1xf32> to vector<1xf32>
    %10 = vector.shape_cast %9 : vector<1xf32> to vector<1x1xf32>
    %11 = vector.shape_cast %10 : vector<1x1xf32> to vector<1x1xf32>
    %12 = vector.broadcast %11 : vector<1x1xf32> to vector<1x128xf32>
    %c0_5 = arith.constant 0 : index
    %c0_6 = arith.constant 0 : index
    %13 = vector.load %arg3[%c0_5, %c0_6] : memref<1x128xf32, #tpu.memory_space<vmem>>, vector<1x128xf32>
    tpu.vector_store %arg3[%c0_5, %c0_6], %12 {strides = array<i32>} : memref<1x128xf32, #tpu.memory_space<vmem>>, vector<1x128xf32>,
    return
  }
  func.func @transform_0(%arg0: i32) -> (i32, i32) {
    %c0_i32 = arith.constant 0 : i32
    %c0_i32_0 = arith.constant 0 : i32
    return %arg0, %c0_i32 : i32, i32
  }
  func.func @transform_1(%arg0: i32) -> (i32, i32) {
    %c0_i32 = arith.constant 0 : i32
    %c0_i32_0 = arith.constant 0 : i32
    return %arg0, %c0_i32 : i32, i32
  }
  func.func @transform_2(%arg0: i32) -> (i32, i32) {
    %c0_i32 = arith.constant 0 : i32
    %c0_i32_0 = arith.constant 0 : i32
    return %c0_i32, %arg0 : i32, i32
  }
}

</mosaic_0001>

<llo_original>
// kernel: tpu_custom_call.1
$region0: #{tpu_custom_call.1}
  #allocation0 [shape = 'u32[]', space=smem, size = 0x4, offset = 0x4, fixed_abs, tag = 'smem constant byte address 0x4 - core index']
  #allocation1 [shape = 'u32[72,128]{1,0:T(1,128)}', space=vmem, size = 0x9000, scoped, tag = 'internal scratch']
  %s0 = inlined_call_operand.vmem [shape: f32[8,32], index: 0, kind: input, shape index: {}]
  %s1 = inlined_call_operand.vmem [shape: s32[8,1], index: 1, kind: input, shape index: {}]
  %s2 = inlined_call_operand.hbm [shape: f32[1,128], index: 2, kind: output, shape index: {}]
  %s3 = sld [smem:[#allocation0]]
  $region18: #{tpu_custom_call.1} parent=0
    _
  %s5 = ssub.s32 1, %s3
  %s6 = scalar_select 0, %s5, %s3
  $region1: #{tpu_custom_call.1} parent=0
    #allocation2 [shape = 'u8[512]{0}', space=vmem, size = 0x400, scoped, tag = 'output window, operand 0, single buffered']
    #allocation3 [shape = 's32[1]{0}', space=sflag, size = 0x4, scoped, tag = 'scoped memory for tpu_custom_call.1']
    %7 = vsyncpa [#allocation3], 0
    // Predicated region
    $region2: #{tpu_custom_call.1} parent=1 // pred_check
      _
    $region3: #{tpu_custom_call.1} parent=1 // pred_check_branch
      %9 = sbr.rel (0) target = $region5
    $region4: #{tpu_custom_call.1} parent=1 // pred_region
      _
    $region5: #{tpu_custom_call.1} parent=1 // pred_fallthru
      _
    // Predicated region
    $region6: #{tpu_custom_call.1} parent=1 // pred_check
      _
    $region7: #{tpu_custom_call.1} parent=1 // pred_check_branch
      %11 = sbr.rel (0) target = $region9
    $region8: #{tpu_custom_call.1} parent=1 // pred_region
      _
    $region9: #{tpu_custom_call.1} parent=1 // pred_fallthru
      _
    %v12 = vld [vmem:[%s0] sm:$0xff]
    %v13 = vld [vmem:[%s1] sm:$0xff]
    %v14 = vlaneseq
    %v15 = vand.u32 %v14, 127
    %16 = vset.pattern.permute.xlu0 0
    %17 = vperm.xlu0 %16, %v13
    %v18 = vpop.permute.xlu0 %17
    %vm19 = vcmp.eq.s32.totalorder %v15, %v18
    %v20 = vsel %vm19, %v12, 0.0
    %vm21 = vcmask 261120
    %v22 = vsel %vm21, %v20, 0.0
    %23 = vadd.xlane.f32.xlu0 %v22
    %v24 = vpop.xlane.xlu0 %23
    %v25 = vrot.slane %v24, 4
    %v26 = vadd.f32 %v24, %v25
    %v27 = vrot.slane %v26, 2
    %v28 = vadd.f32 %v26, %v27
    %v29 = vrot.slane %v28, 1
    %v30 = vadd.f32 %v28, %v29
    %31 = vst [vmem:[#allocation2] sm:$0x1] %v30
    // Predicated region
    $region10: #{tpu_custom_call.1} parent=1 // pred_check
      _
    $region11: #{tpu_custom_call.1} parent=1 // pred_check_branch
      %33 = sbr.rel (0) target = $region13
    $region12: #{tpu_custom_call.1} parent=1 // pred_region
      %35 = vsyncadd [#allocation3], 0
      %s37 = sshll.u32 [#allocation2], 4
      %s38 = int_to_ptr.vmem [resolvable:$true] %s37
      %s39 = sshll.u32 %s2, 4
      %s40 = int_to_ptr.hbm [resolvable:$true] %s39
      %42 = dma.vmem_to_hbm [thread:$0]  %s38, 16, %s40, [#allocation3]
    $region13: #{tpu_custom_call.1} parent=1 // pred_fallthru
      _
    // Predicated region
    $region14: #{tpu_custom_call.1} parent=1 // pred_check
      _
    $region15: #{tpu_custom_call.1} parent=1 // pred_check_branch
      %44 = sbr.rel (0) target = $region17
    $region16: #{tpu_custom_call.1} parent=1 // pred_region
      %46 = dma.done [#allocation3], 16
    $region17: #{tpu_custom_call.1} parent=1 // pred_fallthru
      _
    %47 = vsyncpa [#allocation3], 1

</llo_original>
